<compile_context>
chip_gen: v7x
topology: tpu7x:2x2x1
jax: 0.10.0
libtpu: 0.0.40
codegen_flags: <defaults>
</compile_context>

<pallas_src>
import functools

import jax
import jax.numpy as jnp
from jax.experimental import pallas as pl
from jax.experimental.pallas import tpu as pltpu


def _round_up(n, m):
    return ((n + m - 1) // m) * m


def _mlp_kernel(x_ref, w1_ref, b1_ref, w2_ref, b2_ref, w3_ref, b3_ref, o_ref):
    # Entire hot path (3 matmuls + biases + 2 ReLUs) fused per batch tile.
    # Layer 1 in f32 (small K, keeps input precision); layers 2/3 use bf16
    # weights + activations with f32 MXU accumulation.  Bias/ReLU in f32.
    h = jnp.dot(x_ref[...], w1_ref[...], preferred_element_type=jnp.float32)
    h = jnp.maximum(h + b1_ref[...], 0.0)

    h = jnp.dot(h.astype(w2_ref.dtype), w2_ref[...],
                preferred_element_type=jnp.float32)
    h = jnp.maximum(h + b2_ref[...], 0.0)

    out = jnp.dot(h.astype(w3_ref.dtype), w3_ref[...],
                  preferred_element_type=jnp.float32)
    o_ref[...] = (out + b3_ref[...]).astype(o_ref.dtype)


def prepare_params(params, *, weight_dtype=jnp.bfloat16):
    """One-time (outside jit) weight preparation.

    - fc1 weight stays f32 (tiny; preserves first-layer precision).
    - fc2/fc3 weights cast to `weight_dtype` (bf16) once -> no per-call cast.
    - fc3 weight/bias zero-padded so the output feature dim is a multiple of
      128 -> lane-dense, unmasked vector stores in the kernel.
    - biases reshaped to [1, features] (broadcast rows) in f32.
    """
    hidden = params["w1"].shape[1]
    output_dim = params["w3"].shape[1]
    out_pad = _round_up(max(output_dim, 128), 128)

    w3 = params["w3"]
    b3 = params["b3"]
    if out_pad != output_dim:
        w3 = jnp.pad(w3, ((0, 0), (0, out_pad - output_dim)))
        b3 = jnp.pad(b3, ((0, out_pad - output_dim),))

    return {
        "w1": params["w1"].astype(jnp.float32),
        "b1": params["b1"].reshape(1, hidden).astype(jnp.float32),
        "w2": params["w2"].astype(weight_dtype),
        "b2": params["b2"].reshape(1, hidden).astype(jnp.float32),
        "w3": w3.astype(weight_dtype),
        "b3": b3.reshape(1, out_pad).astype(jnp.float32),
    }


@functools.partial(jax.jit,
                   static_argnames=("output_dim", "tile_b", "out_dtype"))
def delta_dynamics_forward(x, prepared, *, output_dim, tile_b=None,
                           out_dtype=jnp.float32):
    """x: [B, input_dim] float32.  prepared: output of `prepare_params`.

    Returns [B, output_dim] in `out_dtype` (default float32).
    """
    B, input_dim = x.shape
    hidden = prepared["w1"].shape[1]
    out_pad = prepared["w3"].shape[1]

    # ---- batch tile: multiple of 16 (bf16 packing); >=2 grid steps when the
    # batch is large enough so both TensorCores get work on v7x, tiles capped
    # at 512 rows (sweet spot for v6e/v5e step-overhead amortization). ----
    if tile_b is None:
        if B < 128:
            tile_b = _round_up(B, 16)              # single tile, grid of 1
        else:
            tile_b = min(512, _round_up((B + 1) // 2, 16))
    tile_b = _round_up(tile_b, 16)
    B_pad = _round_up(B, tile_b)

    # Only batch padding remains in the per-call path (x stays f32, no cast).
    x_p = x if B_pad == B else jnp.pad(x, ((0, B_pad - B), (0, 0)))

    grid = (B_pad // tile_b,)

    w_itemsize = jnp.dtype(prepared["w2"].dtype).itemsize
    out_itemsize = jnp.dtype(out_dtype).itemsize
    flops = 2 * B_pad * (input_dim * hidden + hidden * hidden + hidden * out_pad)
    bytes_accessed = (
        B_pad * input_dim * 4                               # x (f32)
        + input_dim * hidden * 4                            # w1 (f32)
        + (hidden * hidden + hidden * out_pad) * w_itemsize  # w2, w3
        + (2 * hidden + out_pad) * 4                        # biases (f32)
        + B_pad * out_pad * out_itemsize                    # output
    )

    out = pl.pallas_call(
        _mlp_kernel,
        out_shape=jax.ShapeDtypeStruct((B_pad, out_pad), out_dtype),
        grid_spec=pltpu.PrefetchScalarGridSpec(
            num_scalar_prefetch=0,
            grid=grid,
            in_specs=[
                pl.BlockSpec((tile_b, input_dim), lambda i: (i, 0)),   # x tile
                pl.BlockSpec((input_dim, hidden), lambda i: (0, 0)),   # w1 (grid-invariant)
                pl.BlockSpec((1, hidden), lambda i: (0, 0)),           # b1
                pl.BlockSpec((hidden, hidden), lambda i: (0, 0)),      # w2
                pl.BlockSpec((1, hidden), lambda i: (0, 0)),           # b2
                pl.BlockSpec((hidden, out_pad), lambda i: (0, 0)),     # w3 (lane-padded)
                pl.BlockSpec((1, out_pad), lambda i: (0, 0)),          # b3
            ],
            out_specs=pl.BlockSpec((tile_b, out_pad), lambda i: (i, 0)),
        ),
        compiler_params=pltpu.CompilerParams(
            dimension_semantics=("parallel",),
        ),
        cost_estimate=pl.CostEstimate(
            flops=flops, transcendentals=0, bytes_accessed=bytes_accessed),
    )(x_p, prepared["w1"], prepared["b1"], prepared["w2"], prepared["b2"],
      prepared["w3"], prepared["b3"])

    # Slice back to the logical shape (un-pad batch and output features).
    return out[:B, :output_dim]


def delta_dynamics_forward_steps(xs, prepared, *, output_dim, **kwargs):
    """Rollout helper: xs is [num_steps, B, input_dim].

    Folds all steps into ONE pallas_call so the weights (grid-invariant
    BlockSpecs) are DMA'd into VMEM once instead of once per step, and the
    launch overhead is paid once.
    """
    num_steps, B, input_dim = xs.shape
    flat = xs.reshape(num_steps * B, input_dim)
    out = delta_dynamics_forward(flat, prepared, output_dim=output_dim, **kwargs)
    return out.reshape(num_steps, B, output_dim)


def init_params(key, input_dim, output_dim, hidden=256, dtype=jnp.float32):
    """Deterministic init mimicking PyTorch nn.Linear default U(-1/sqrt(fan_in), +).
    Weights stored as [in_features, out_features]."""
    ks = jax.random.split(key, 6)

    def lin(kw, kb, fan_in, fan_out):
        bound = 1.0 / jnp.sqrt(fan_in)
        w = jax.random.uniform(kw, (fan_in, fan_out), dtype, -bound, bound)
        b = jax.random.uniform(kb, (fan_out,), dtype, -bound, bound)
        return w, b

    w1, b1 = lin(ks[0], ks[1], input_dim, hidden)
    w2, b2 = lin(ks[2], ks[3], hidden, hidden)
    w3, b3 = lin(ks[4], ks[5], hidden, output_dim)
    return {"w1": w1, "b1": b1, "w2": w2, "b2": b2, "w3": w3, "b3": b3}


def reference_forward(x, params):
    h = jnp.maximum(x @ params["w1"] + params["b1"], 0.0)
    h = jnp.maximum(h @ params["w2"] + params["b2"], 0.0)
    return h @ params["w3"] + params["b3"]


if __name__ == "__main__":
    key = jax.random.PRNGKey(0)
    k_x, k_x2, k_p = jax.random.split(key, 3)

    input_dim = 48      # e.g. state + action concatenation
    output_dim = 24     # delta-state prediction
    raw_params = init_params(k_p, input_dim, output_dim)
    prepared = prepare_params(raw_params)   # one-time cast/pad, outside jit

    # Small-batch case (single grid step; matches the real B~16 workload).
    batch = 16
    x = jax.random.normal(k_x, (batch, input_dim), dtype=jnp.float32)
    out = jax.block_until_ready(
        delta_dynamics_forward(x, prepared, output_dim=output_dim))
    ref = reference_forward(x, raw_params)
    assert out.shape == (batch, output_dim), out.shape
    # Layers 2/3 use bf16 weights/activations with f32 accumulation.
    assert jnp.allclose(out, ref, atol=3e-2, rtol=3e-2), "mismatch (B=16)"

    # Mid-size batch: exercises the >=2-step grid (both TensorCores on v7x).
    batch2 = 160
    x2 = jax.random.normal(k_x2, (batch2, input_dim), dtype=jnp.float32)
    out2 = jax.block_until_ready(
        delta_dynamics_forward(x2, prepared, output_dim=output_dim))
    ref2 = reference_forward(x2, raw_params)
    assert out2.shape == (batch2, output_dim), out2.shape
    assert jnp.allclose(out2, ref2, atol=3e-2, rtol=3e-2), "mismatch (B=160)"

    # Rollout helper: 4 steps folded into one pallas_call (weights DMA'd once).
    xs = jax.random.normal(k_x, (4, batch, input_dim), dtype=jnp.float32)
    outs = jax.block_until_ready(
        delta_dynamics_forward_steps(xs, prepared, output_dim=output_dim))
    refs = reference_forward(xs.reshape(-1, input_dim), raw_params)
    assert outs.shape == (4, batch, output_dim), outs.shape
    assert jnp.allclose(outs.reshape(-1, output_dim), refs,
                        atol=3e-2, rtol=3e-2), "mismatch (rollout)"

    print("KERNEL_OK")
</pallas_src>

<mosaic_0001>
module attributes {stable_mosaic.version = 11 : i64} {
  func.func @_mlp_kernel(%arg0: i32, %arg1: memref<16x48xf32, #tpu.memory_space<vmem>>, %arg2: memref<48x256xf32, #tpu.memory_space<vmem>>, %arg3: memref<1x256xf32, #tpu.memory_space<vmem>>, %arg4: memref<256x256xbf16, #tpu.memory_space<vmem>>, %arg5: memref<1x256xf32, #tpu.memory_space<vmem>>, %arg6: memref<256x128xbf16, #tpu.memory_space<vmem>>, %arg7: memref<1x128xf32, #tpu.memory_space<vmem>>, %arg8: memref<16x128xf32, #tpu.memory_space<vmem>>) attributes {dimension_semantics = [#tpu.dimension_semantics<parallel>], iteration_bounds = array<i64: 1>, scalar_prefetch = 0 : i64, scratch_operands = 0 : i64, tpu.core_type = #tpu.core_type<tc>, window_params = [{transform_indices = @transform_0, window_bounds = array<i64: 16, 48>}, {pipeline_mode = #tpu.pipeline_mode<synchronous>, transform_indices = @transform_1, window_bounds = array<i64: 48, 256>}, {pipeline_mode = #tpu.pipeline_mode<synchronous>, transform_indices = @transform_2, window_bounds = array<i64: 1, 256>}, {pipeline_mode = #tpu.pipeline_mode<synchronous>, transform_indices = @transform_3, window_bounds = array<i64: 256, 256>}, {pipeline_mode = #tpu.pipeline_mode<synchronous>, transform_indices = @transform_4, window_bounds = array<i64: 1, 256>}, {pipeline_mode = #tpu.pipeline_mode<synchronous>, transform_indices = @transform_5, window_bounds = array<i64: 256, 128>}, {pipeline_mode = #tpu.pipeline_mode<synchronous>, transform_indices = @transform_6, window_bounds = array<i64: 1, 128>}, {transform_indices = @transform_7, window_bounds = array<i64: 16, 128>}]} {
    %c0 = arith.constant 0 : index
    %c0_0 = arith.constant 0 : index
    %0 = vector.load %arg1[%c0, %c0_0] : memref<16x48xf32, #tpu.memory_space<vmem>>, vector<16x48xf32>
    %c0_1 = arith.constant 0 : index
    %c0_2 = arith.constant 0 : index
    %1 = vector.load %arg2[%c0_1, %c0_2] : memref<48x256xf32, #tpu.memory_space<vmem>>, vector<48x256xf32>
    %cst = arith.constant dense<0.000000e+00> : vector<16x256xf32>
    %2 = tpu.matmul %0, %1, %cst {dimension_numbers = #tpu.dot_dimension_numbers<[1], [0], [0], [1], [0, 0, 1, 1], [], []>} : vector<16x48xf32>, vector<48x256xf32>, vector<16x256xf32> -> vector<16x256xf32>
    %c0_3 = arith.constant 0 : index
    %c0_4 = arith.constant 0 : index
    %3 = vector.load %arg3[%c0_3, %c0_4] : memref<1x256xf32, #tpu.memory_space<vmem>>, vector<1x256xf32>
    %4 = vector.broadcast %3 : vector<1x256xf32> to vector<16x256xf32>
    %5 = arith.addf %2, %4 : vector<16x256xf32>
    %cst_5 = arith.constant 0.000000e+00 : f32
    %6 = vector.broadcast %cst_5 : f32 to vector<16x256xf32>
    %7 = arith.maximumf %5, %6 : vector<16x256xf32>
    %8 = arith.truncf %7 : vector<16x256xf32> to vector<16x256xbf16>
    %c0_6 = arith.constant 0 : index
    %c0_7 = arith.constant 0 : index
    %9 = vector.load %arg4[%c0_6, %c0_7] : memref<256x256xbf16, #tpu.memory_space<vmem>>, vector<256x256xbf16>
    %cst_8 = arith.constant dense<0.000000e+00> : vector<16x256xf32>
    %10 = tpu.matmul %8, %9, %cst_8 {dimension_numbers = #tpu.dot_dimension_numbers<[1], [0], [0], [1], [0, 0, 1, 1], [], []>} : vector<16x256xbf16>, vector<256x256xbf16>, vector<16x256xf32> -> vector<16x256xf32>
    %c0_9 = arith.constant 0 : index
    %c0_10 = arith.constant 0 : index
    %11 = vector.load %arg5[%c0_9, %c0_10] : memref<1x256xf32, #tpu.memory_space<vmem>>, vector<1x256xf32>
    %12 = vector.broadcast %11 : vector<1x256xf32> to vector<16x256xf32>
    %13 = arith.addf %10, %12 : vector<16x256xf32>
    %cst_11 = arith.constant 0.000000e+00 : f32
    %14 = vector.broadcast %cst_11 : f32 to vector<16x256xf32>
    %15 = arith.maximumf %13, %14 : vector<16x256xf32>
    %16 = arith.truncf %15 : vector<16x256xf32> to vector<16x256xbf16>
    %c0_12 = arith.constant 0 : index
    %c0_13 = arith.constant 0 : index
    %17 = vector.load %arg6[%c0_12, %c0_13] : memref<256x128xbf16, #tpu.memory_space<vmem>>, vector<256x128xbf16>
    %cst_14 = arith.constant dense<0.000000e+00> : vector<16x128xf32>
    %18 = tpu.matmul %16, %17, %cst_14 {dimension_numbers = #tpu.dot_dimension_numbers<[1], [0], [0], [1], [0, 0, 1, 1], [], []>} : vector<16x256xbf16>, vector<256x128xbf16>, vector<16x128xf32> -> vector<16x128xf32>
    %c0_15 = arith.constant 0 : index
    %c0_16 = arith.constant 0 : index
    %19 = vector.load %arg7[%c0_15, %c0_16] : memref<1x128xf32, #tpu.memory_space<vmem>>, vector<1x128xf32>
    %20 = vector.broadcast %19 : vector<1x128xf32> to vector<16x128xf32>
    %21 = arith.addf %18, %20 : vector<16x128xf32>
    %c0_17 = arith.constant 0 : index
    %c0_18 = arith.constant 0 : index
    %22 = vector.load %arg8[%c0_17, %c0_18] : memref<16x128xf32, #tpu.memory_space<vmem>>, vector<16x128xf32>
    tpu.vector_store %arg8[%c0_17, %c0_18], %21 {strides = array<i32>} : memref<16x128xf32, #tpu.memory_space<vmem>>, vector<16x128xf32>,
    return
  }
  func.func @transform_0(%arg0: i32) -> (i32, i32) {
    %c0_i32 = arith.constant 0 : i32
    %c0_i32_0 = arith.constant 0 : i32
    return %arg0, %c0_i32 : i32, i32
  }
  func.func @transform_1(%arg0: i32) -> (i32, i32) {
    %c0_i32 = arith.constant 0 : i32
    %c0_i32_0 = arith.constant 0 : i32
    %c0_i32_1 = arith.constant 0 : i32
    return %c0_i32, %c0_i32_0 : i32, i32
  }
  func.func @transform_2(%arg0: i32) -> (i32, i32) {
    %c0_i32 = arith.constant 0 : i32
    %c0_i32_0 = arith.constant 0 : i32
    %c0_i32_1 = arith.constant 0 : i32
    return %c0_i32, %c0_i32_0 : i32, i32
  }
  func.func @transform_3(%arg0: i32) -> (i32, i32) {
    %c0_i32 = arith.constant 0 : i32
    %c0_i32_0 = arith.constant 0 : i32
    %c0_i32_1 = arith.constant 0 : i32
    return %c0_i32, %c0_i32_0 : i32, i32
  }
  func.func @transform_4(%arg0: i32) -> (i32, i32) {
    %c0_i32 = arith.constant 0 : i32
    %c0_i32_0 = arith.constant 0 : i32
    %c0_i32_1 = arith.constant 0 : i32
    return %c0_i32, %c0_i32_0 : i32, i32
  }
  func.func @transform_5(%arg0: i32) -> (i32, i32) {
    %c0_i32 = arith.constant 0 : i32
    %c0_i32_0 = arith.constant 0 : i32
    %c0_i32_1 = arith.constant 0 : i32
    return %c0_i32, %c0_i32_0 : i32, i32
  }
  func.func @transform_6(%arg0: i32) -> (i32, i32) {
    %c0_i32 = arith.constant 0 : i32
    %c0_i32_0 = arith.constant 0 : i32
    %c0_i32_1 = arith.constant 0 : i32
    return %c0_i32, %c0_i32_0 : i32, i32
  }
  func.func @transform_7(%arg0: i32) -> (i32, i32) {
    %c0_i32 = arith.constant 0 : i32
    %c0_i32_0 = arith.constant 0 : i32
    return %arg0, %c0_i32 : i32, i32
  }
}

</mosaic_0001>

<llo_original>
// kernel: delta_dynamics_forward.1
$region0: #{delta_dynamics_forward.1}
  #allocation0 [shape = 'u32[]', space=smem, size = 0x4, offset = 0x4, fixed_abs, tag = 'smem constant byte address 0x4 - core index']
  #allocation1 [shape = 'u32[144,128]{1,0:T(1,128)}', space=vmem, size = 0x12000, scoped, tag = 'internal scratch']
  %s0 = inlined_call_operand.hbm [shape: f32[16,48], index: 0, kind: input, shape index: {}]
  %s1 = inlined_call_operand.hbm [shape: f32[48,256], index: 1, kind: input, shape index: {}]
  %s2 = inlined_call_operand.vmem [shape: f32[1,256], index: 2, kind: input, shape index: {}]
  %s3 = inlined_call_operand.hbm [shape: bf16[256,256], index: 3, kind: input, shape index: {}]
  %s4 = inlined_call_operand.vmem [shape: f32[1,256], index: 4, kind: input, shape index: {}]
  %s5 = inlined_call_operand.hbm [shape: bf16[256,128], index: 5, kind: input, shape index: {}]
  %s6 = inlined_call_operand.vmem [shape: f32[1,128], index: 6, kind: input, shape index: {}]
  %s7 = inlined_call_operand.hbm [shape: f32[16,128], index: 7, kind: output, shape index: {}]
  %s8 = sld [smem:[#allocation0]]
  $region54: #{delta_dynamics_forward.1} parent=0
    _
  %s10 = ssub.s32 1, %s8
  %s11 = scalar_select 0, %s10, %s8
  $region1: #{delta_dynamics_forward.1} parent=0
    #allocation2 [shape = 'u8[8192]{0}', space=vmem, size = 0x2000, scoped, tag = 'input window, operand 0, single buffered']
    #allocation3 [shape = 's32[1]{0}', space=sflag, size = 0x4, scoped, tag = 'scoped memory for delta_dynamics_forward.1']
    #allocation4 [shape = 's32[1]{0}', space=sflag, size = 0x4, scoped, tag = 'scoped memory for delta_dynamics_forward.1']
    #allocation5 [shape = 'u8[49152]{0}', space=vmem, size = 0xc000, scoped, tag = 'input window, operand 1, single buffered']
    #allocation6 [shape = 's32[1]{0}', space=sflag, size = 0x4, scoped, tag = 'scoped memory for delta_dynamics_forward.1']
    #allocation7 [shape = 'u8[131072]{0}', space=vmem, size = 0x20000, scoped, tag = 'input window, operand 3, single buffered']
    #allocation8 [shape = 'u8[65536]{0}', space=vmem, size = 0x10000, scoped, tag = 'input window, operand 5, single buffered']
    #allocation9 [shape = 's32[1]{0}', space=sflag, size = 0x4, scoped, tag = 'scoped memory for delta_dynamics_forward.1']
    #allocation10 [shape = 'u8[8192]{0}', space=vmem, size = 0x2000, scoped, tag = 'output window, operand 0, single buffered']
    %12 = vsyncpa [#allocation3], 0
    %13 = vsyncpa [#allocation6], 0
    %14 = vsyncpa [#allocation9], 0
    %15 = vsyncpa [#allocation4], 0
    // Predicated region
    $region2: #{delta_dynamics_forward.1} parent=1 // pred_check
      _
    $region3: #{delta_dynamics_forward.1} parent=1 // pred_check_branch
      %17 = sbr.rel (0) target = $region5
    $region4: #{delta_dynamics_forward.1} parent=1 // pred_region
      %s19 = ssub.s32 256, 256
      %20 = vsyncadd [#allocation3], %s19
      %s21 = sshll.u32 [#allocation2], 4
      %s22 = int_to_ptr.vmem [resolvable:$true] %s21
      %27 = dma.hbm_to_vmem [thread:$0]  %s0, 256, %s22, [#allocation3], 128, 128, 8
    $region5: #{delta_dynamics_forward.1} parent=1 // pred_fallthru
      _
    // Predicated region
    $region6: #{delta_dynamics_forward.1} parent=1 // pred_check
      _
    $region7: #{delta_dynamics_forward.1} parent=1 // pred_check_branch
      %29 = sbr.rel (0) target = $region9
    $region8: #{delta_dynamics_forward.1} parent=1 // pred_region
      %s31 = ssub.s32 1536, 1536
      %32 = vsyncadd [#allocation6], %s31
      %s33 = sshll.u32 [#allocation5], 4
      %s34 = int_to_ptr.vmem [resolvable:$true] %s33
      %39 = dma.hbm_to_vmem [thread:$0]  %s1, 1536, %s34, [#allocation6], 256, 256, 16
    $region9: #{delta_dynamics_forward.1} parent=1 // pred_fallthru
      _
    // Predicated region
    $region10: #{delta_dynamics_forward.1} parent=1 // pred_check
      _
    $region11: #{delta_dynamics_forward.1} parent=1 // pred_check_branch
      %41 = sbr.rel (0) target = $region13
    $region12: #{delta_dynamics_forward.1} parent=1 // pred_region
      _
    $region13: #{delta_dynamics_forward.1} parent=1 // pred_fallthru
      _
    // Predicated region
    $region14: #{delta_dynamics_forward.1} parent=1 // pred_check
      _
    $region15: #{delta_dynamics_forward.1} parent=1 // pred_check_branch
      %43 = sbr.rel (0) target = $region17
    $region16: #{delta_dynamics_forward.1} parent=1 // pred_region
      %s45 = ssub.s32 4096, 4096
      %46 = vsyncadd [#allocation6], %s45
      %s47 = sshll.u32 [#allocation7], 4
      %s48 = int_to_ptr.vmem [resolvable:$true] %s47
      %53 = dma.hbm_to_vmem [thread:$0]  %s3, 4096, %s48, [#allocation6], 128, 128, 8
    $region17: #{delta_dynamics_forward.1} parent=1 // pred_fallthru
      _
    // Predicated region
    $region18: #{delta_dynamics_forward.1} parent=1 // pred_check
      _
    $region19: #{delta_dynamics_forward.1} parent=1 // pred_check_branch
      %55 = sbr.rel (0) target = $region21
    $region20: #{delta_dynamics_forward.1} parent=1 // pred_region
      _
    $region21: #{delta_dynamics_forward.1} parent=1 // pred_fallthru
      _
    // Predicated region
    $region22: #{delta_dynamics_forward.1} parent=1 // pred_check
      _
    $region23: #{delta_dynamics_forward.1} parent=1 // pred_check_branch
      %57 = sbr.rel (0) target = $region25
    $region24: #{delta_dynamics_forward.1} parent=1 // pred_region
      %s59 = ssub.s32 2048, 2048
      %60 = vsyncadd [#allocation9], %s59
      %s61 = sshll.u32 [#allocation8], 4
      %s62 = int_to_ptr.vmem [resolvable:$true] %s61
      %67 = dma.hbm_to_vmem [thread:$0]  %s5, 2048, %s62, [#allocation9], 64, 64, 4
    $region25: #{delta_dynamics_forward.1} parent=1 // pred_fallthru
      _
    // Predicated region
    $region26: #{delta_dynamics_forward.1} parent=1 // pred_check
      _
    $region27: #{delta_dynamics_forward.1} parent=1 // pred_check_branch
      %69 = sbr.rel (0) target = $region29
    $region28: #{delta_dynamics_forward.1} parent=1 // pred_region
      _
    $region29: #{delta_dynamics_forward.1} parent=1 // pred_fallthru
      _
    // Predicated region
    $region30: #{delta_dynamics_forward.1} parent=1 // pred_check
      _
    $region31: #{delta_dynamics_forward.1} parent=1 // pred_check_branch
      %71 = sbr.rel (0) target = $region33
    $region32: #{delta_dynamics_forward.1} parent=1 // pred_region
      %72 = dma.done [#allocation3], 256
    $region33: #{delta_dynamics_forward.1} parent=1 // pred_fallthru
      _
    // Predicated region
    $region34: #{delta_dynamics_forward.1} parent=1 // pred_check
      _
    $region35: #{delta_dynamics_forward.1} parent=1 // pred_check_branch
      %74 = sbr.rel (0) target = $region37
    $region36: #{delta_dynamics_forward.1} parent=1 // pred_region
      %75 = dma.done [#allocation6], 1536
    $region37: #{delta_dynamics_forward.1} parent=1 // pred_fallthru
      _
    // Predicated region
    $region38: #{delta_dynamics_forward.1} parent=1 // pred_check
      _
    $region39: #{delta_dynamics_forward.1} parent=1 // pred_check_branch
      %77 = sbr.rel (0) target = $region41
    $region40: #{delta_dynamics_forward.1} parent=1 // pred_region
      %78 = dma.done [#allocation6], 4096
    $region41: #{delta_dynamics_forward.1} parent=1 // pred_fallthru
      _
    // Predicated region
    $region42: #{delta_dynamics_forward.1} parent=1 // pred_check
      _
    $region43: #{delta_dynamics_forward.1} parent=1 // pred_check_branch
      %80 = sbr.rel (0) target = $region45
    $region44: #{delta_dynamics_forward.1} parent=1 // pred_region
      %81 = dma.done [#allocation9], 2048
    $region45: #{delta_dynamics_forward.1} parent=1 // pred_fallthru
      _
    %v83 = vld [vmem:[#allocation2] sm:$0xff]
    %v84 = vld [vmem:[#allocation2 + $0x8] sm:$0xff]
    %v85 = vld [vmem:[#allocation5] sm:$0xff]
    %v86 = vld [vmem:[#allocation5 + $0x8] sm:$0xff]
    %v87 = vld [vmem:[#allocation5 + $0x10] sm:$0xff]
    %v88 = vld [vmem:[#allocation5 + $0x18] sm:$0xff]
    %v89 = vld [vmem:[#allocation5 + $0x20] sm:$0xff]
    %v90 = vld [vmem:[#allocation5 + $0x28] sm:$0xff]
    %v91 = vld [vmem:[#allocation5 + $0x30] sm:$0xff]
    %v92 = vld [vmem:[#allocation5 + $0x38] sm:$0xff]
    %v93 = vld [vmem:[#allocation5 + $0x40] sm:$0xff]
    %v94 = vld [vmem:[#allocation5 + $0x48] sm:$0xff]
    %v95 = vld [vmem:[#allocation5 + $0x50] sm:$0xff]
    %v96 = vld [vmem:[#allocation5 + $0x58] sm:$0xff]
    %v97 = vld [vmem:[%s2] sm:$0x3]
    %v99 = vlaneseq
    %v100 = vshrl.u32 %v99, 7
    %v101 = vsub.s32 0, %v100
    %v102 = vrot.slane %v97, %v101
    %v103 = vlaneseq
    %v104 = vshrl.u32 %v103, 7
    %v105 = vsub.s32 1, %v104
    %v106 = vrot.slane %v97, %v105
    %vm109 = vcmask 392192
    %v111 = vsel %vm109, %v83, 0
    %v114 = vsel %vm109, %v84, 0
    %116 = vmatprep.subr.mxu0 %v86
    %117 = vmatpush1.msra.mxu0 %v85
    %118 = vmatprep.subr.mxu0 %v88
    %119 = vmatpush1.msra.mxu0 %v87
    %120 = vmatprep.subr.mxu0 %v90
    %121 = vmatpush1.msra.mxu0 %v89
    %122 = vmatprep.subr.mxu0 %v92
    %123 = vmatpush1.msra.mxu0 %v91
    %124 = vmatprep.subr.mxu0 %v94
    %125 = vmatpush1.msra.mxu0 %v93
    %126 = vmatprep.subr.mxu0 %v96
    %127 = vmatpush1.msra.mxu0 %v95
    %128 = vmatprep.subr.mxu0 0.0
    %129 = vmatpush1.msra.mxu0 0.0
    %130 = vmatprep.subr.mxu0 0.0
    %131 = vmatpush1.msra.mxu0 0.0
    %132 = vmatprep.subr.mxu0 0.0
    %133 = vmatpush1.msra.mxu0 0.0
    %134 = vmatprep.subr.mxu0 0.0
    %135 = vmatpush1.msra.mxu0 0.0
    %136 = vmatprep.subr.mxu0 0.0
    %137 = vmatpush1.msra.mxu0 0.0
    %138 = vmatprep.subr.mxu0 0.0
    %139 = vmatpush1.msra.mxu0 0.0
    %140 = vmatprep.subr.mxu0 0.0
    %141 = vmatpush1.msra.mxu0 0.0
    %142 = vmatprep.subr.mxu0 0.0
    %143 = vmatpush1.msra.mxu0 0.0
    %144 = vmatprep.subr.mxu0 0.0
    %145 = vmatpush1.msra.mxu0 0.0
    %146 = vmatprep.subr.mxu0 0.0
    %147 = vmatpush1.msra.mxu0 0.0
    %148 = vmatprep.subr.mxu0 0.0
    %149 = vmatpush1.msra.mxu0 0.0
    %150 = vmatprep.subr.mxu0 0.0
    %151 = vmatpush1.msra.mxu0 0.0
    %152 = vmatprep.subr.mxu0 0.0
    %153 = vmatpush1.msra.mxu0 0.0
    %154 = vmatprep.subr.mxu0 0.0
    %155 = vmatpush1.msra.mxu0 0.0
    %156 = vmatprep.subr.mxu0 0.0
    %157 = vmatpush1.msra.mxu0 0.0
    %158 = vmatprep.subr.mxu0 0.0
    %159 = vmatpush1.msra.mxu0 0.0
    %160 = vmatprep.subr.mxu0 0.0
    %161 = vmatpush1.msra.mxu0 0.0
    %162 = vmatprep.subr.mxu0 0.0
    %163 = vmatpush1.msra.mxu0 0.0
    %164 = vmatprep.subr.mxu0 0.0
    %165 = vmatpush1.msra.mxu0 0.0
    %166 = vmatprep.subr.mxu0 0.0
    %167 = vmatpush1.msra.mxu0 0.0
    %168 = vmatprep.subr.mxu0 0.0
    %169 = vmatpush1.msra.mxu0 0.0
    %170 = vmatprep.subr.mxu0 0.0
    %171 = vmatpush1.msra.mxu0 0.0
    %172 = vmatprep.subr.mxu0 0.0
    %173 = vmatpush1.msra.mxu0 0.0
    %174 = vmatprep.subr.mxu0 0.0
    %175 = vmatpush1.msra.mxu0 0.0
    %176 = vmatprep.subr.mxu0 0.0
    %177 = vmatpush1.msra.mxu0 0.0
    %178 = vmatprep.subr.mxu0 0.0
    %179 = vmatpush1.msra.mxu0 0.0
    %180 = vmatprep.mubr.f32.mxu0 0.0
    %181 = vmatmul.mubr.f32.gmra.mrb[0].mxu0 %v111
    %v182 = vpop.f32.mrb[0].mxu0
    %v183 = vadd.f32 %v102, %v182
    %v184 = vpop.f32.mrb[0].mxu0
    %v185 = vadd.f32 %v106, %v184
    %186 = vmatprep.mubr.f32.mxu0 0.0
    %187 = vmatmul.mubr.f32.gmra.mrb[0].mxu0 %v114
    %v188 = vpop.f32.mrb[0].mxu0
    %v189 = vadd.f32 %v102, %v188
    %v190 = vpop.f32.mrb[0].mxu0
    %v191 = vadd.f32 %v106, %v190
    %192 = vdwg.mxu0
    %v193 = vmax.f32 %v183, 0.0
    %v194 = vmax.f32 %v185, 0.0
    %v195 = vmax.f32 %v189, 0.0
    %v196 = vmax.f32 %v191, 0.0
    %v197 = vpack.c.bf16 %v195, %v193
    %v198 = vpack.c.bf16 %v196, %v194
    %v199 = vld [vmem:[#allocation7] sm:$0xff]
    %v200 = vld [vmem:[#allocation7 + $0x8] sm:$0xff]
    %v201 = vld [vmem:[#allocation7 + $0x10] sm:$0xff]
    %v202 = vld [vmem:[#allocation7 + $0x18] sm:$0xff]
    %v203 = vld [vmem:[#allocation7 + $0x20] sm:$0xff]
    %v204 = vld [vmem:[#allocation7 + $0x28] sm:$0xff]
    %v205 = vld [vmem:[#allocation7 + $0x30] sm:$0xff]
    %v206 = vld [vmem:[#allocation7 + $0x38] sm:$0xff]
    %v207 = vld [vmem:[#allocation7 + $0x40] sm:$0xff]
    %v208 = vld [vmem:[#allocation7 + $0x48] sm:$0xff]
    %v209 = vld [vmem:[#allocation7 + $0x50] sm:$0xff]
    %v210 = vld [vmem:[#allocation7 + $0x58] sm:$0xff]
    %v211 = vld [vmem:[#allocation7 + $0x60] sm:$0xff]
    %v212 = vld [vmem:[#allocation7 + $0x68] sm:$0xff]
    %v213 = vld [vmem:[#allocation7 + $0x70] sm:$0xff]
    %v214 = vld [vmem:[#allocation7 + $0x78] sm:$0xff]
    %v215 = vld [vmem:[#allocation7 + $0x80] sm:$0xff]
    %v216 = vld [vmem:[#allocation7 + $0x88] sm:$0xff]
    %v217 = vld [vmem:[#allocation7 + $0x90] sm:$0xff]
    %v218 = vld [vmem:[#allocation7 + $0x98] sm:$0xff]
    %v219 = vld [vmem:[#allocation7 + $0xa0] sm:$0xff]
    %v220 = vld [vmem:[#allocation7 + $0xa8] sm:$0xff]
    %v221 = vld [vmem:[#allocation7 + $0xb0] sm:$0xff]
    %v222 = vld [vmem:[#allocation7 + $0xb8] sm:$0xff]
    %v223 = vld [vmem:[#allocation7 + $0xc0] sm:$0xff]
    %v224 = vld [vmem:[#allocation7 + $0xc8] sm:$0xff]
    %v225 = vld [vmem:[#allocation7 + $0xd0] sm:$0xff]
    %v226 = vld [vmem:[#allocation7 + $0xd8] sm:$0xff]
    %v227 = vld [vmem:[#allocation7 + $0xe0] sm:$0xff]
    %v228 = vld [vmem:[#allocation7 + $0xe8] sm:$0xff]
    %v229 = vld [vmem:[#allocation7 + $0xf0] sm:$0xff]
    %v230 = vld [vmem:[#allocation7 + $0xf8] sm:$0xff]
    %v231 = vld [vmem:[%s4] sm:$0x3]
    %v233 = vlaneseq
    %v234 = vshrl.u32 %v233, 7
    %v235 = vsub.s32 0, %v234
    %v236 = vrot.slane %v231, %v235
    %v237 = vlaneseq
    %v238 = vshrl.u32 %v237, 7
    %v239 = vsub.s32 1, %v238
    %v240 = vrot.slane %v231, %v239
    %v275 = vunpack.c.l.b16 %v199
    %v276 = vunpack.c.h.b16 %v199
    %v277 = vunpack.c.l.b16 %v200
    %v278 = vunpack.c.h.b16 %v200
    %v279 = vunpack.c.l.b16 %v201
    %v280 = vunpack.c.h.b16 %v201
    %v281 = vunpack.c.l.b16 %v202
    %v282 = vunpack.c.h.b16 %v202
    %v283 = vunpack.c.l.b16 %v203
    %v284 = vunpack.c.h.b16 %v203
    %v285 = vunpack.c.l.b16 %v204
    %v286 = vunpack.c.h.b16 %v204
    %v287 = vunpack.c.l.b16 %v205
    %v288 = vunpack.c.h.b16 %v205
    %v289 = vunpack.c.l.b16 %v206
    %v290 = vunpack.c.h.b16 %v206
    %v291 = vunpack.c.l.b16 %v207
    %v292 = vunpack.c.h.b16 %v207
    %v293 = vunpack.c.l.b16 %v208
    %v294 = vunpack.c.h.b16 %v208
    %v295 = vunpack.c.l.b16 %v209
    %v296 = vunpack.c.h.b16 %v209
    %v297 = vunpack.c.l.b16 %v210
    %v298 = vunpack.c.h.b16 %v210
    %v299 = vunpack.c.l.b16 %v211
    %v300 = vunpack.c.h.b16 %v211
    %v301 = vunpack.c.l.b16 %v212
    %v302 = vunpack.c.h.b16 %v212
    %v303 = vunpack.c.l.b16 %v213
    %v304 = vunpack.c.h.b16 %v213
    %v305 = vunpack.c.l.b16 %v214
    %v306 = vunpack.c.h.b16 %v214
    %v307 = vunpack.c.l.b16 %v215
    %v308 = vunpack.c.h.b16 %v215
    %v309 = vunpack.c.l.b16 %v216
    %v310 = vunpack.c.h.b16 %v216
    %v311 = vunpack.c.l.b16 %v217
    %v312 = vunpack.c.h.b16 %v217
    %v313 = vunpack.c.l.b16 %v218
    %v314 = vunpack.c.h.b16 %v218
    %v315 = vunpack.c.l.b16 %v219
    %v316 = vunpack.c.h.b16 %v219
    %v317 = vunpack.c.l.b16 %v220
    %v318 = vunpack.c.h.b16 %v220
    %v319 = vunpack.c.l.b16 %v221
    %v320 = vunpack.c.h.b16 %v221
    %v321 = vunpack.c.l.b16 %v222
    %v322 = vunpack.c.h.b16 %v222
    %v323 = vunpack.c.l.b16 %v223
    %v324 = vunpack.c.h.b16 %v223
    %v325 = vunpack.c.l.b16 %v224
    %v326 = vunpack.c.h.b16 %v224
    %v327 = vunpack.c.l.b16 %v225
    %v328 = vunpack.c.h.b16 %v225
    %v329 = vunpack.c.l.b16 %v226
    %v330 = vunpack.c.h.b16 %v226
    %v331 = vunpack.c.l.b16 %v227
    %v332 = vunpack.c.h.b16 %v227
    %v333 = vunpack.c.l.b16 %v228
    %v334 = vunpack.c.h.b16 %v228
    %v335 = vunpack.c.l.b16 %v229
    %v336 = vunpack.c.h.b16 %v229
    %v337 = vunpack.c.l.b16 %v230
    %v338 = vunpack.c.h.b16 %v230
    %v339 = vpack.c.b16 %v277, %v275
    %v340 = vpack.c.b16 %v278, %v276
    %v341 = vpack.c.b16 %v281, %v279
    %v342 = vpack.c.b16 %v282, %v280
    %v343 = vpack.c.b16 %v285, %v283
    %v344 = vpack.c.b16 %v286, %v284
    %v345 = vpack.c.b16 %v289, %v287
    %v346 = vpack.c.b16 %v290, %v288
    %v347 = vpack.c.b16 %v293, %v291
    %v348 = vpack.c.b16 %v294, %v292
    %v349 = vpack.c.b16 %v297, %v295
    %v350 = vpack.c.b16 %v298, %v296
    %v351 = vpack.c.b16 %v301, %v299
    %v352 = vpack.c.b16 %v302, %v300
    %v353 = vpack.c.b16 %v305, %v303
    %v354 = vpack.c.b16 %v306, %v304
    %v355 = vpack.c.b16 %v309, %v307
    %v356 = vpack.c.b16 %v310, %v308
    %v357 = vpack.c.b16 %v313, %v311
    %v358 = vpack.c.b16 %v314, %v312
    %v359 = vpack.c.b16 %v317, %v315
    %v360 = vpack.c.b16 %v318, %v316
    %v361 = vpack.c.b16 %v321, %v319
    %v362 = vpack.c.b16 %v322, %v320
    %v363 = vpack.c.b16 %v325, %v323
    %v364 = vpack.c.b16 %v326, %v324
    %v365 = vpack.c.b16 %v329, %v327
    %v366 = vpack.c.b16 %v330, %v328
    %v367 = vpack.c.b16 %v333, %v331
    %v368 = vpack.c.b16 %v334, %v332
    %v369 = vpack.c.b16 %v337, %v335
    %v370 = vpack.c.b16 %v338, %v336
    %403 = vmatprep.subr.bf16.mxu0 %v340
    %404 = vmatpush1.bf16.msra.mxu0 %v339
    %405 = vmatprep.subr.bf16.mxu0 %v342
    %406 = vmatpush1.bf16.msra.mxu0 %v341
    %407 = vmatprep.subr.bf16.mxu0 %v344
    %408 = vmatpush1.bf16.msra.mxu0 %v343
    %409 = vmatprep.subr.bf16.mxu0 %v346
    %410 = vmatpush1.bf16.msra.mxu0 %v345
    %411 = vmatprep.subr.bf16.mxu0 %v348
    %412 = vmatpush1.bf16.msra.mxu0 %v347
    %413 = vmatprep.subr.bf16.mxu0 %v350
    %414 = vmatpush1.bf16.msra.mxu0 %v349
    %415 = vmatprep.subr.bf16.mxu0 %v352
    %416 = vmatpush1.bf16.msra.mxu0 %v351
    %417 = vmatprep.subr.bf16.mxu0 %v354
    %418 = vmatpush1.bf16.msra.mxu0 %v353
    %419 = vmatprep.subr.bf16.mxu0 %v356
    %420 = vmatpush1.bf16.msra.mxu0 %v355
    %421 = vmatprep.subr.bf16.mxu0 %v358
    %422 = vmatpush1.bf16.msra.mxu0 %v357
    %423 = vmatprep.subr.bf16.mxu0 %v360
    %424 = vmatpush1.bf16.msra.mxu0 %v359
    %425 = vmatprep.subr.bf16.mxu0 %v362
    %426 = vmatpush1.bf16.msra.mxu0 %v361
    %427 = vmatprep.subr.bf16.mxu0 %v364
    %428 = vmatpush1.bf16.msra.mxu0 %v363
    %429 = vmatprep.subr.bf16.mxu0 %v366
    %430 = vmatpush1.bf16.msra.mxu0 %v365
    %431 = vmatprep.subr.bf16.mxu0 %v368
    %432 = vmatpush1.bf16.msra.mxu0 %v367
    %433 = vmatprep.subr.bf16.mxu0 %v370
    %434 = vmatpush1.bf16.msra.mxu0 %v369
    %435 = vmatprep.mubr.bf16.mxu0 %v198
    %436 = vmatmul.mubr.bf16.gmra.mrb[0].mxu0 %v197
    %v437 = vpop.f32.mrb[0].mxu0
    %v438 = vadd.f32 %v236, %v437
    %v439 = vpop.f32.mrb[0].mxu0
    %v440 = vadd.f32 %v240, %v439
    %v441 = vpop.f32.mrb[0].mxu0
    %v442 = vadd.f32 %v236, %v441
    %v443 = vpop.f32.mrb[0].mxu0
    %v444 = vadd.f32 %v240, %v443
    %445 = vdwg.mxu0
    %v446 = vmax.f32 %v438, 0.0
    %v447 = vmax.f32 %v440, 0.0
    %v448 = vmax.f32 %v442, 0.0
    %v449 = vmax.f32 %v444, 0.0
    %v450 = vpack.c.bf16 %v448, %v446
    %v451 = vpack.c.bf16 %v449, %v447
    %v452 = vld [vmem:[#allocation8] sm:$0xf]
    %v453 = vld [vmem:[#allocation8 + $0x4] sm:$0xf]
    %v454 = vld [vmem:[#allocation8 + $0x8] sm:$0xf]
    %v455 = vld [vmem:[#allocation8 + $0xc] sm:$0xf]
    %v456 = vld [vmem:[#allocation8 + $0x10] sm:$0xf]
    %v457 = vld [vmem:[#allocation8 + $0x14] sm:$0xf]
    %v458 = vld [vmem:[#allocation8 + $0x18] sm:$0xf]
    %v459 = vld [vmem:[#allocation8 + $0x1c] sm:$0xf]
    %v460 = vld [vmem:[#allocation8 + $0x20] sm:$0xf]
    %v461 = vld [vmem:[#allocation8 + $0x24] sm:$0xf]
    %v462 = vld [vmem:[#allocation8 + $0x28] sm:$0xf]
    %v463 = vld [vmem:[#allocation8 + $0x2c] sm:$0xf]
    %v464 = vld [vmem:[#allocation8 + $0x30] sm:$0xf]
    %v465 = vld [vmem:[#allocation8 + $0x34] sm:$0xf]
    %v466 = vld [vmem:[#allocation8 + $0x38] sm:$0xf]
    %v467 = vld [vmem:[#allocation8 + $0x3c] sm:$0xf]
    %v468 = vld [vmem:[#allocation8 + $0x40] sm:$0xf]
    %v469 = vld [vmem:[#allocation8 + $0x44] sm:$0xf]
    %v470 = vld [vmem:[#allocation8 + $0x48] sm:$0xf]
    %v471 = vld [vmem:[#allocation8 + $0x4c] sm:$0xf]
    %v472 = vld [vmem:[#allocation8 + $0x50] sm:$0xf]
    %v473 = vld [vmem:[#allocation8 + $0x54] sm:$0xf]
    %v474 = vld [vmem:[#allocation8 + $0x58] sm:$0xf]
    %v475 = vld [vmem:[#allocation8 + $0x5c] sm:$0xf]
    %v476 = vld [vmem:[#allocation8 + $0x60] sm:$0xf]
    %v477 = vld [vmem:[#allocation8 + $0x64] sm:$0xf]
    %v478 = vld [vmem:[#allocation8 + $0x68] sm:$0xf]
    %v479 = vld [vmem:[#allocation8 + $0x6c] sm:$0xf]
    %v480 = vld [vmem:[#allocation8 + $0x70] sm:$0xf]
    %v481 = vld [vmem:[#allocation8 + $0x74] sm:$0xf]
    %v482 = vld [vmem:[#allocation8 + $0x78] sm:$0xf]
    %v483 = vld [vmem:[#allocation8 + $0x7c] sm:$0xf]
    %v484 = vld [vmem:[%s6] sm:$0x1]
    %v486 = vlaneseq
    %v487 = vshrl.u32 %v486, 7
    %v488 = vsub.s32 0, %v487
    %v489 = vrot.slane %v484, %v488
    %v523 = vunpack.c.l.b16 %v452
    %v524 = vunpack.c.l.b16 %v453
    %v525 = vunpack.c.l.b16 %v454
    %v526 = vunpack.c.l.b16 %v455
    %v527 = vunpack.c.l.b16 %v456
    %v528 = vunpack.c.l.b16 %v457
    %v529 = vunpack.c.l.b16 %v458
    %v530 = vunpack.c.l.b16 %v459
    %v531 = vunpack.c.l.b16 %v460
    %v532 = vunpack.c.l.b16 %v461
    %v533 = vunpack.c.l.b16 %v462
    %v534 = vunpack.c.l.b16 %v463
    %v535 = vunpack.c.l.b16 %v464
    %v536 = vunpack.c.l.b16 %v465
    %v537 = vunpack.c.l.b16 %v466
    %v538 = vunpack.c.l.b16 %v467
    %v539 = vunpack.c.l.b16 %v468
    %v540 = vunpack.c.l.b16 %v469
    %v541 = vunpack.c.l.b16 %v470
    %v542 = vunpack.c.l.b16 %v471
    %v543 = vunpack.c.l.b16 %v472
    %v544 = vunpack.c.l.b16 %v473
    %v545 = vunpack.c.l.b16 %v474
    %v546 = vunpack.c.l.b16 %v475
    %v547 = vunpack.c.l.b16 %v476
    %v548 = vunpack.c.l.b16 %v477
    %v549 = vunpack.c.l.b16 %v478
    %v550 = vunpack.c.l.b16 %v479
    %v551 = vunpack.c.l.b16 %v480
    %v552 = vunpack.c.l.b16 %v481
    %v553 = vunpack.c.l.b16 %v482
    %v554 = vunpack.c.l.b16 %v483
    %v555 = vpack.c.b16 %v524, %v523
    %v556 = vpack.c.b16 %v526, %v525
    %v557 = vpack.c.b16 %v528, %v527
    %v558 = vpack.c.b16 %v530, %v529
    %v559 = vpack.c.b16 %v532, %v531
    %v560 = vpack.c.b16 %v534, %v533
    %v561 = vpack.c.b16 %v536, %v535
    %v562 = vpack.c.b16 %v538, %v537
    %v563 = vpack.c.b16 %v540, %v539
    %v564 = vpack.c.b16 %v542, %v541
    %v565 = vpack.c.b16 %v544, %v543
    %v566 = vpack.c.b16 %v546, %v545
    %v567 = vpack.c.b16 %v548, %v547
    %v568 = vpack.c.b16 %v550, %v549
    %v569 = vpack.c.b16 %v552, %v551
    %v570 = vpack.c.b16 %v554, %v553
    %587 = vmatprep.subr.bf16.mxu0 0
    %588 = vmatpush1.bf16.msra.mxu0 %v555
    %589 = vmatprep.subr.bf16.mxu0 0
    %590 = vmatpush1.bf16.msra.mxu0 %v556
    %591 = vmatprep.subr.bf16.mxu0 0
    %592 = vmatpush1.bf16.msra.mxu0 %v557
    %593 = vmatprep.subr.bf16.mxu0 0
    %594 = vmatpush1.bf16.msra.mxu0 %v558
    %595 = vmatprep.subr.bf16.mxu0 0
    %596 = vmatpush1.bf16.msra.mxu0 %v559
    %597 = vmatprep.subr.bf16.mxu0 0
    %598 = vmatpush1.bf16.msra.mxu0 %v560
    %599 = vmatprep.subr.bf16.mxu0 0
    %600 = vmatpush1.bf16.msra.mxu0 %v561
    %601 = vmatprep.subr.bf16.mxu0 0
    %602 = vmatpush1.bf16.msra.mxu0 %v562
    %603 = vmatprep.subr.bf16.mxu0 0
    %604 = vmatpush1.bf16.msra.mxu0 %v563
    %605 = vmatprep.subr.bf16.mxu0 0
    %606 = vmatpush1.bf16.msra.mxu0 %v564
    %607 = vmatprep.subr.bf16.mxu0 0
    %608 = vmatpush1.bf16.msra.mxu0 %v565
    %609 = vmatprep.subr.bf16.mxu0 0
    %610 = vmatpush1.bf16.msra.mxu0 %v566
    %611 = vmatprep.subr.bf16.mxu0 0
    %612 = vmatpush1.bf16.msra.mxu0 %v567
    %613 = vmatprep.subr.bf16.mxu0 0
    %614 = vmatpush1.bf16.msra.mxu0 %v568
    %615 = vmatprep.subr.bf16.mxu0 0
    %616 = vmatpush1.bf16.msra.mxu0 %v569
    %617 = vmatprep.subr.bf16.mxu0 0
    %618 = vmatpush1.bf16.msra.mxu0 %v570
    %619 = vmatprep.mubr.bf16.mxu0 %v451
    %620 = vmatmul.mubr.bf16.gmra.mrb[0].mxu0 %v450
    %v621 = vpop.f32.mrb[0].mxu0
    %v622 = vadd.f32 %v489, %v621
    %v623 = vpop.f32.mrb[0].mxu0
    %v624 = vpop.f32.mrb[0].mxu0
    %v625 = vadd.f32 %v489, %v624
    %v626 = vpop.f32.mrb[0].mxu0
    %627 = vdwg.mxu0
    %628 = vst [vmem:[#allocation10] sm:$0xff] %v622
    %629 = vst [vmem:[#allocation10 + $0x8] sm:$0xff] %v625
    // Predicated region
    $region46: #{delta_dynamics_forward.1} parent=1 // pred_check
      _
    $region47: #{delta_dynamics_forward.1} parent=1 // pred_check_branch
      %631 = sbr.rel (0) target = $region49
    $region48: #{delta_dynamics_forward.1} parent=1 // pred_region
      %s633 = ssub.s32 256, 256
      %634 = vsyncadd [#allocation4], %s633
      %s635 = sshll.u32 [#allocation10], 4
      %s636 = int_to_ptr.vmem [resolvable:$true] %s635
      %641 = dma.vmem_to_hbm [thread:$0]  %s636, 256, %s7, [#allocation4], 128, 128, 8
    $region49: #{delta_dynamics_forward.1} parent=1 // pred_fallthru
      _
    // Predicated region
    $region50: #{delta_dynamics_forward.1} parent=1 // pred_check
      _
    $region51: #{delta_dynamics_forward.1} parent=1 // pred_check_branch
      %643 = sbr.rel (0) target = $region53
    $region52: #{delta_dynamics_forward.1} parent=1 // pred_region
      %644 = dma.done [#allocation4], 256
    $region53: #{delta_dynamics_forward.1} parent=1 // pred_fallthru
      _
    %645 = vsyncpa [#allocation3], 1
    %646 = vsyncpa [#allocation6], 1
    %647 = vsyncpa [#allocation9], 1
    %648 = vsyncpa [#allocation4], 1

</llo_original>
